<compile_context>
chip_gen: v6e
topology: v6e:2x2x1
jax: 0.10.0
libtpu: 0.0.40
codegen_flags: <defaults>
</compile_context>

<pallas_src>
import functools

import jax
import jax.numpy as jnp
from jax.experimental import pallas as pl
from jax.experimental.pallas import tpu as pltpu


def _make_divisible(v, divisor, min_value=None):
    if min_value is None:
        min_value = divisor
    new_v = max(min_value, int(v + divisor / 2) // divisor * divisor)
    if new_v < 0.9 * v:
        new_v += divisor
    return new_v


def _round_up(n, m):
    return (n + m - 1) // m * m


def _choose_bblk(B, C, S_pad, itemsize,
                 block_budget_bytes=8 * 1024 * 1024, target_steps=8):
    """Pick how many batch rows to process per grid step.

    Bound: input block + output block, each double-buffered by the Pallas
    pipeline -> ~4x the block bytes must fit inside `block_budget_bytes`.
    Keep at least ~target_steps grid steps when the batch allows it (v7x
    megacore + pipeline overlap)."""
    per_batch = C * S_pad * itemsize
    max_by_vmem = max(1, block_budget_bytes // (4 * per_batch))
    desired = max(1, B // target_steps)
    bblk = int(min(B, max_by_vmem, desired))
    while B % bblk != 0:          # keep an exact divisor of B (simple, exact tiling)
        bblk -= 1
    return bblk


def _se_kernel(x_ref, w1t_ref, b1_ref, w2t_ref, b2_ref, o_ref, *, inv_spatial):
    # x_ref / o_ref: (Bblk, C, S_pad)
    # w1t_ref: (C, Hd)  b1_ref: (1, Hd)  w2t_ref: (Hd, C)  b2_ref: (1, C)

    # Global average pool over the (zero-padded) spatial lanes; accumulate in
    # f32 and divide by the TRUE spatial size so the padding is a no-op.
    pooled = jnp.sum(x_ref[...].astype(jnp.float32), axis=-1) * inv_spatial  # (Bblk, C)

    # fc1 + SiLU, batched over the block:  (Bblk, C) @ (C, Hd) + (1, Hd)
    h = jnp.dot(pooled, w1t_ref[...], preferred_element_type=jnp.float32) + b1_ref[...]
    h = h * jax.nn.sigmoid(h)

    # fc2 + Sigmoid:  (Bblk, Hd) @ (Hd, C) + (1, C)
    g = jnp.dot(h, w2t_ref[...], preferred_element_type=jnp.float32) + b2_ref[...]
    g = jax.nn.sigmoid(g)                                                    # (Bblk, C)

    # Re-read the tile from VMEM for the scale (don't keep an upcast copy
    # live across pooling + scaling); broadcast the gate over lanes.
    o_ref[...] = (x_ref[...] * g[:, :, None].astype(x_ref.dtype)).astype(o_ref.dtype)


def se_layer(x, w1, b1, w2, b2):
    """x: (B, C, D, H, W).  w1: (hidden, C), b1: (hidden,), w2: (C, hidden), b2: (C,)."""
    B, C, D, H, W = x.shape
    S = D * H * W
    hidden = w1.shape[0]

    # Lane-dense layout: pad flattened spatial axis to a multiple of 128.
    S_pad = _round_up(S, 128)
    x_flat = x.reshape(B, C, S)
    if S_pad != S:
        x_flat = jnp.pad(x_flat, ((0, 0), (0, 0), (0, S_pad - S)))

    # Pre-transpose weights (wrapper side) so the kernel runs batched
    # row-major matmuls; biases as broadcastable rows.
    w1t = jnp.transpose(w1)            # (C, hidden)
    w2t = jnp.transpose(w2)            # (hidden, C)
    b1_row = b1.reshape(1, hidden)
    b2_row = b2.reshape(1, C)

    bblk = _choose_bblk(B, C, S_pad, jnp.dtype(x.dtype).itemsize)
    grid = (B // bblk,)

    kernel = functools.partial(_se_kernel, inv_spatial=1.0 / float(S))

    out_flat = pl.pallas_call(
        kernel,
        out_shape=jax.ShapeDtypeStruct((B, C, S_pad), x.dtype),
        grid_spec=pltpu.PrefetchScalarGridSpec(
            num_scalar_prefetch=0,
            grid=grid,
            in_specs=[
                pl.BlockSpec((bblk, C, S_pad), lambda b: (b, 0, 0)),
                pl.BlockSpec((C, hidden), lambda b: (0, 0)),   # resident weights
                pl.BlockSpec((1, hidden), lambda b: (0, 0)),
                pl.BlockSpec((hidden, C), lambda b: (0, 0)),
                pl.BlockSpec((1, C), lambda b: (0, 0)),
            ],
            out_specs=pl.BlockSpec((bblk, C, S_pad), lambda b: (b, 0, 0)),
        ),
        compiler_params=pltpu.CompilerParams(
            dimension_semantics=("parallel",),
            vmem_limit_bytes=48 * 1024 * 1024,
        ),
    )(x_flat, w1t, b1_row, w2t, b2_row)

    if S_pad != S:
        out_flat = out_flat[:, :, :S]
    return out_flat.reshape(B, C, D, H, W)


def se_layer_ref(x, w1, b1, w2, b2):
    y = jnp.mean(x, axis=(2, 3, 4))                      # (B, C)
    h = y @ w1.T + b1                                    # (B, hidden)
    h = h * jax.nn.sigmoid(h)                            # SiLU
    g = jax.nn.sigmoid(h @ w2.T + b2)                    # (B, C)
    return x * g[:, :, None, None, None]


if __name__ == "__main__":
    # Module config: inp = oup = 32, reduction = 4 -> hidden = _make_divisible(8, 8) = 8
    inp = oup = 32
    reduction = 4
    hidden = _make_divisible(inp // reduction, 8)

    key = jax.random.PRNGKey(0)
    kx, k1, k2, k3, k4 = jax.random.split(key, 5)

    # Deterministic parameter init (Linear weights: (out_features, in_features)).
    w1 = jax.random.normal(k1, (hidden, oup), dtype=jnp.float32) * 0.1
    b1 = jax.random.normal(k2, (hidden,), dtype=jnp.float32) * 0.1
    w2 = jax.random.normal(k3, (oup, hidden), dtype=jnp.float32) * 0.1
    b2 = jax.random.normal(k4, (oup,), dtype=jnp.float32) * 0.1

    # Case 1: spatial size already a multiple of 128 (S = 2*8*8 = 128).
    x1 = jax.random.normal(kx, (2, oup, 2, 8, 8), dtype=jnp.float32)
    out1 = jax.block_until_ready(se_layer(x1, w1, b1, w2, b2))
    ref1 = se_layer_ref(x1, w1, b1, w2, b2)
    assert jnp.allclose(out1, ref1, atol=1e-5, rtol=1e-5), "mismatch vs reference (case 1)"

    # Case 2: ragged spatial size (S = 3*5*5 = 75, padded to 128 inside the wrapper).
    x2 = jax.random.normal(kx, (4, oup, 3, 5, 5), dtype=jnp.float32)
    out2 = jax.block_until_ready(se_layer(x2, w1, b1, w2, b2))
    ref2 = se_layer_ref(x2, w1, b1, w2, b2)
    assert jnp.allclose(out2, ref2, atol=1e-5, rtol=1e-5), "mismatch vs reference (case 2)"

    print("KERNEL_OK")
</pallas_src>

<mosaic_0001>
module attributes {stable_mosaic.version = 11 : i64} {
  func.func @_se_kernel(%arg0: i32, %arg1: memref<1x32x128xf32, #tpu.memory_space<vmem>>, %arg2: memref<32x8xf32, #tpu.memory_space<vmem>>, %arg3: memref<1x8xf32, #tpu.memory_space<vmem>>, %arg4: memref<8x32xf32, #tpu.memory_space<vmem>>, %arg5: memref<1x32xf32, #tpu.memory_space<vmem>>, %arg6: memref<1x32x128xf32, #tpu.memory_space<vmem>>) attributes {dimension_semantics = [#tpu.dimension_semantics<parallel>], iteration_bounds = array<i64: 2>, scalar_prefetch = 0 : i64, scratch_operands = 0 : i64, tpu.core_type = #tpu.core_type<tc>, window_params = [{transform_indices = @transform_0, window_bounds = array<i64: 1, 32, 128>}, {pipeline_mode = #tpu.pipeline_mode<synchronous>, transform_indices = @transform_1, window_bounds = array<i64: 32, 8>}, {pipeline_mode = #tpu.pipeline_mode<synchronous>, transform_indices = @transform_2, window_bounds = array<i64: 1, 8>}, {pipeline_mode = #tpu.pipeline_mode<synchronous>, transform_indices = @transform_3, window_bounds = array<i64: 8, 32>}, {pipeline_mode = #tpu.pipeline_mode<synchronous>, transform_indices = @transform_4, window_bounds = array<i64: 1, 32>}, {transform_indices = @transform_5, window_bounds = array<i64: 1, 32, 128>}]} {
    %c0 = arith.constant 0 : index
    %c0_0 = arith.constant 0 : index
    %c0_1 = arith.constant 0 : index
    %0 = vector.load %arg1[%c0, %c0_0, %c0_1] : memref<1x32x128xf32, #tpu.memory_space<vmem>>, vector<1x32x128xf32>
    %cst = arith.constant dense<0.000000e+00> : vector<1x32xf32>
    %1 = vector.multi_reduction <add>, %0, %cst [2] : vector<1x32x128xf32> to vector<1x32xf32>
    %cst_2 = arith.constant 7.812500e-03 : f32
    %2 = vector.broadcast %cst_2 : f32 to vector<1x32xf32>
    %3 = arith.mulf %1, %2 : vector<1x32xf32>
    %c0_3 = arith.constant 0 : index
    %c0_4 = arith.constant 0 : index
    %4 = vector.load %arg2[%c0_3, %c0_4] : memref<32x8xf32, #tpu.memory_space<vmem>>, vector<32x8xf32>
    %cst_5 = arith.constant dense<0.000000e+00> : vector<1x8xf32>
    %5 = tpu.matmul %3, %4, %cst_5 {dimension_numbers = #tpu.dot_dimension_numbers<[1], [0], [0], [1], [0, 0, 1, 1], [], []>} : vector<1x32xf32>, vector<32x8xf32>, vector<1x8xf32> -> vector<1x8xf32>
    %c0_6 = arith.constant 0 : index
    %c0_7 = arith.constant 0 : index
    %6 = vector.load %arg3[%c0_6, %c0_7] : memref<1x8xf32, #tpu.memory_space<vmem>>, vector<1x8xf32>
    %7 = arith.addf %5, %6 : vector<1x8xf32>
    %8 = arith.negf %7 : vector<1x8xf32>
    %9 = math.exp %8 : vector<1x8xf32>
    %cst_8 = arith.constant 1.000000e+00 : f32
    %10 = vector.broadcast %cst_8 : f32 to vector<1x8xf32>
    %11 = arith.addf %10, %9 : vector<1x8xf32>
    %12 = arith.divf %10, %11 : vector<1x8xf32>
    %13 = arith.mulf %7, %12 : vector<1x8xf32>
    %c0_9 = arith.constant 0 : index
    %c0_10 = arith.constant 0 : index
    %14 = vector.load %arg4[%c0_9, %c0_10] : memref<8x32xf32, #tpu.memory_space<vmem>>, vector<8x32xf32>
    %cst_11 = arith.constant dense<0.000000e+00> : vector<1x32xf32>
    %15 = tpu.matmul %13, %14, %cst_11 {dimension_numbers = #tpu.dot_dimension_numbers<[1], [0], [0], [1], [0, 0, 1, 1], [], []>} : vector<1x8xf32>, vector<8x32xf32>, vector<1x32xf32> -> vector<1x32xf32>
    %c0_12 = arith.constant 0 : index
    %c0_13 = arith.constant 0 : index
    %16 = vector.load %arg5[%c0_12, %c0_13] : memref<1x32xf32, #tpu.memory_space<vmem>>, vector<1x32xf32>
    %17 = arith.addf %15, %16 : vector<1x32xf32>
    %18 = arith.negf %17 : vector<1x32xf32>
    %19 = math.exp %18 : vector<1x32xf32>
    %cst_14 = arith.constant 1.000000e+00 : f32
    %20 = vector.broadcast %cst_14 : f32 to vector<1x32xf32>
    %21 = arith.addf %20, %19 : vector<1x32xf32>
    %22 = arith.divf %20, %21 : vector<1x32xf32>
    %c0_15 = arith.constant 0 : index
    %c0_16 = arith.constant 0 : index
    %c0_17 = arith.constant 0 : index
    %23 = vector.load %arg1[%c0_15, %c0_16, %c0_17] : memref<1x32x128xf32, #tpu.memory_space<vmem>>, vector<1x32x128xf32>
    %24 = vector.shape_cast %22 : vector<1x32xf32> to vector<1x32x1xf32>
    %25 = vector.broadcast %24 : vector<1x32x1xf32> to vector<1x32x128xf32>
    %26 = arith.mulf %23, %25 : vector<1x32x128xf32>
    %c0_18 = arith.constant 0 : index
    %c0_19 = arith.constant 0 : index
    %c0_20 = arith.constant 0 : index
    %27 = vector.load %arg6[%c0_18, %c0_19, %c0_20] : memref<1x32x128xf32, #tpu.memory_space<vmem>>, vector<1x32x128xf32>
    tpu.vector_store %arg6[%c0_18, %c0_19, %c0_20], %26 {strides = array<i32>} : memref<1x32x128xf32, #tpu.memory_space<vmem>>, vector<1x32x128xf32>,
    return
  }
  func.func @transform_0(%arg0: i32) -> (i32, i32, i32) {
    %c0_i32 = arith.constant 0 : i32
    %c0_i32_0 = arith.constant 0 : i32
    %c0_i32_1 = arith.constant 0 : i32
    return %arg0, %c0_i32, %c0_i32_0 : i32, i32, i32
  }
  func.func @transform_1(%arg0: i32) -> (i32, i32) {
    %c0_i32 = arith.constant 0 : i32
    %c0_i32_0 = arith.constant 0 : i32
    %c0_i32_1 = arith.constant 0 : i32
    return %c0_i32, %c0_i32_0 : i32, i32
  }
  func.func @transform_2(%arg0: i32) -> (i32, i32) {
    %c0_i32 = arith.constant 0 : i32
    %c0_i32_0 = arith.constant 0 : i32
    %c0_i32_1 = arith.constant 0 : i32
    return %c0_i32, %c0_i32_0 : i32, i32
  }
  func.func @transform_3(%arg0: i32) -> (i32, i32) {
    %c0_i32 = arith.constant 0 : i32
    %c0_i32_0 = arith.constant 0 : i32
    %c0_i32_1 = arith.constant 0 : i32
    return %c0_i32, %c0_i32_0 : i32, i32
  }
  func.func @transform_4(%arg0: i32) -> (i32, i32) {
    %c0_i32 = arith.constant 0 : i32
    %c0_i32_0 = arith.constant 0 : i32
    %c0_i32_1 = arith.constant 0 : i32
    return %c0_i32, %c0_i32_0 : i32, i32
  }
  func.func @transform_5(%arg0: i32) -> (i32, i32, i32) {
    %c0_i32 = arith.constant 0 : i32
    %c0_i32_0 = arith.constant 0 : i32
    %c0_i32_1 = arith.constant 0 : i32
    return %arg0, %c0_i32, %c0_i32_0 : i32, i32, i32
  }
}

</mosaic_0001>

<llo_original>
// kernel: tpu_custom_call.1
$region0: #{tpu_custom_call.1}
  #allocation0 [shape = 'u32[]', space=smem, size = 0x4, offset = 0x4, fixed_abs, tag = 'smem constant byte address 0x4 - core index']
  #allocation1 [shape = 'u32[144,128]{1,0:T(1,128)}', space=vmem, size = 0x12000, scoped, tag = 'internal scratch']
  %s0 = inlined_call_operand.hbm [shape: f32[2,32,128], index: 0, kind: input, shape index: {}]
  %s1 = inlined_call_operand.vmem [shape: f32[32,8], index: 1, kind: input, shape index: {}]
  %s2 = inlined_call_operand.vmem [shape: f32[1,8], index: 2, kind: input, shape index: {}]
  %s3 = inlined_call_operand.vmem [shape: f32[8,32], index: 3, kind: input, shape index: {}]
  %s4 = inlined_call_operand.vmem [shape: f32[1,32], index: 4, kind: input, shape index: {}]
  %s5 = inlined_call_operand.hbm [shape: f32[2,32,128], index: 5, kind: output, shape index: {}]
  %s6 = sld [smem:[#allocation0]]
  $region57: #{tpu_custom_call.1} parent=0
    _
  %s8 = ssub.s32 1, %s6
  %s9 = scalar_select 0, %s8, %s6
  $region1: #{tpu_custom_call.1} parent=0
    #allocation2 [shape = 'u8[32768]{0}', space=vmem, size = 0x8000, scoped, tag = 'input window, operand 0']
    #allocation3 [shape = 's32[2]{0}', space=sflag, size = 0x8, scoped, tag = 'scoped memory for tpu_custom_call.1']
    #allocation4 [shape = 's32[2]{0}', space=sflag, size = 0x8, scoped, tag = 'scoped memory for tpu_custom_call.1']
    #allocation5 [shape = 'u8[32768]{0}', space=vmem, size = 0x8000, scoped, tag = 'output window, operand 0']
    %10 = vsyncpa [#allocation3], 0
    %s11 = scalar_lea.sflag [#allocation3], 1
    %12 = vsyncpa %s11, 0
    %13 = vsyncpa [#allocation4], 0
    %s14 = scalar_lea.sflag [#allocation4], 1
    %15 = vsyncpa %s14, 0
    loop: start=0, step=1, limit=4
    $region2: #{tpu_custom_call.1} parent=1 // loop_pre_header
      _
    $region3: #{tpu_custom_call.1} parent=1 // loop_header
      %s17 = sphi 0, %s21
      %p18 = scmp.ge.s32.totalorder %s17, 4
      %s27 = sphi 0, %s29
      %s30 = sphi 0, %s27
      %s31 = sphi 0, %s30
      %s47 = sphi 0, %s31
      %s51 = sphi 0, %s51
      %s53 = sphi 0, %s51
      %s54 = sphi 0, %s53
      %s68 = sphi 0, %s54
      %s72 = sphi 0, %s72
      %s74 = sphi 0, %s72
      %s75 = sphi 0, %s74
      %s89 = sphi 0, %s75
      %s93 = sphi 0, %s93
      %s95 = sphi 0, %s93
      %s96 = sphi 0, %s95
      %s110 = sphi 0, %s96
      %s114 = sphi 0, %s114
      %s116 = sphi 0, %s114
      %s117 = sphi 0, %s116
      %s131 = sphi 0, %s117
      %s137 = sphi 0, %s139
      %s140 = sphi 0, %s137
      %s141 = sphi 0, %s140
      %s157 = sphi 0, %s141
    $region4: #{tpu_custom_call.1} parent=1 // loop_header_branch
      %20 = sbr.rel (%p18) target = $region8
    $region5: #{tpu_custom_call.1} parent=1 // loop_body
      %s22 = ssub.s32 %s17, 1
      %s23 = ssub.s32 %s17, 2
      %s24 = sadd.s32 %s17, 1
      %s25 = ssub.s32 %s17, %s24
      %p26 = scmp.eq.s32.totalorder %s25, 0
      %s28 = sadd.s32 %s27, 1
      %s29 = scalar_select %p26, %s27, %s28
      %p32 = pneg %p26
      %p33 = scmp.eq.s32.totalorder %s17, 1
      %p34 = por %p32, %p33
      %p35 = scmp.ne.s32.totalorder %s27, %s30
      %p36 = scmp.eq.s32.totalorder %s17, 0
      %p37 = por %p35, %p36
      %p38 = scmp.ne.s32.totalorder %s27, %s30
      %p39 = scmp.eq.s32.totalorder %s22, 1
      %p40 = por %p38, %p39
      %p41 = scmp.ne.s32.totalorder %s30, %s31
      %p42 = scmp.eq.s32.totalorder %s22, 0
      %p43 = por %p41, %p42
      %p44 = scmp.ne.s32.totalorder %s30, %s31
      %p45 = scmp.eq.s32.totalorder %s23, 1
      %p46 = por %p44, %p45
      %p48 = scmp.ne.s32.totalorder %s31, %s47
      %p49 = scmp.eq.s32.totalorder %s23, 0
      %p50 = por %p48, %p49
      %s52 = sadd.s32 %s51, 1
      %p55 = scmp.eq.s32.totalorder %s17, 1
      %p56 = scmp.ne.s32.totalorder %s51, %s53
      %p57 = scmp.eq.s32.totalorder %s17, 0
      %p58 = por %p56, %p57
      %p59 = scmp.ne.s32.totalorder %s51, %s53
      %p60 = scmp.eq.s32.totalorder %s22, 1
      %p61 = por %p59, %p60
      %p62 = scmp.ne.s32.totalorder %s53, %s54
      %p63 = scmp.eq.s32.totalorder %s22, 0
      %p64 = por %p62, %p63
      %p65 = scmp.ne.s32.totalorder %s53, %s54
      %p66 = scmp.eq.s32.totalorder %s23, 1
      %p67 = por %p65, %p66
      %p69 = scmp.ne.s32.totalorder %s54, %s68
      %p70 = scmp.eq.s32.totalorder %s23, 0
      %p71 = por %p69, %p70
      %s73 = sadd.s32 %s72, 1
      %p76 = scmp.eq.s32.totalorder %s17, 1
      %p77 = scmp.ne.s32.totalorder %s72, %s74
      %p78 = scmp.eq.s32.totalorder %s17, 0
      %p79 = por %p77, %p78
      %p80 = scmp.ne.s32.totalorder %s72, %s74
      %p81 = scmp.eq.s32.totalorder %s22, 1
      %p82 = por %p80, %p81
      %p83 = scmp.ne.s32.totalorder %s74, %s75
      %p84 = scmp.eq.s32.totalorder %s22, 0
      %p85 = por %p83, %p84
      %p86 = scmp.ne.s32.totalorder %s74, %s75
      %p87 = scmp.eq.s32.totalorder %s23, 1
      %p88 = por %p86, %p87
      %p90 = scmp.ne.s32.totalorder %s75, %s89
      %p91 = scmp.eq.s32.totalorder %s23, 0
      %p92 = por %p90, %p91
      %s94 = sadd.s32 %s93, 1
      %p97 = scmp.eq.s32.totalorder %s17, 1
      %p98 = scmp.ne.s32.totalorder %s93, %s95
      %p99 = scmp.eq.s32.totalorder %s17, 0
      %p100 = por %p98, %p99
      %p101 = scmp.ne.s32.totalorder %s93, %s95
      %p102 = scmp.eq.s32.totalorder %s22, 1
      %p103 = por %p101, %p102
      %p104 = scmp.ne.s32.totalorder %s95, %s96
      %p105 = scmp.eq.s32.totalorder %s22, 0
      %p106 = por %p104, %p105
      %p107 = scmp.ne.s32.totalorder %s95, %s96
      %p108 = scmp.eq.s32.totalorder %s23, 1
      %p109 = por %p107, %p108
      %p111 = scmp.ne.s32.totalorder %s96, %s110
      %p112 = scmp.eq.s32.totalorder %s23, 0
      %p113 = por %p111, %p112
      %s115 = sadd.s32 %s114, 1
      %p118 = scmp.eq.s32.totalorder %s17, 1
      %p119 = scmp.ne.s32.totalorder %s114, %s116
      %p120 = scmp.eq.s32.totalorder %s17, 0
      %p121 = por %p119, %p120
      %p122 = scmp.ne.s32.totalorder %s114, %s116
      %p123 = scmp.eq.s32.totalorder %s22, 1
      %p124 = por %p122, %p123
      %p125 = scmp.ne.s32.totalorder %s116, %s117
      %p126 = scmp.eq.s32.totalorder %s22, 0
      %p127 = por %p125, %p126
      %p128 = scmp.ne.s32.totalorder %s116, %s117
      %p129 = scmp.eq.s32.totalorder %s23, 1
      %p130 = por %p128, %p129
      %p132 = scmp.ne.s32.totalorder %s117, %s131
      %p133 = scmp.eq.s32.totalorder %s23, 0
      %p134 = por %p132, %p133
      %s135 = ssub.s32 %s17, %s24
      %p136 = scmp.eq.s32.totalorder %s135, 0
      %s138 = sadd.s32 %s137, 1
      %s139 = scalar_select %p136, %s137, %s138
      %p142 = pneg %p136
      %p143 = scmp.eq.s32.totalorder %s17, 1
      %p144 = por %p142, %p143
      %p145 = scmp.ne.s32.totalorder %s137, %s140
      %p146 = scmp.eq.s32.totalorder %s17, 0
      %p147 = por %p145, %p146
      %p148 = scmp.ne.s32.totalorder %s137, %s140
      %p149 = scmp.eq.s32.totalorder %s22, 1
      %p150 = por %p148, %p149
      %p151 = scmp.ne.s32.totalorder %s140, %s141
      %p152 = scmp.eq.s32.totalorder %s22, 0
      %p153 = por %p151, %p152
      %p154 = scmp.ne.s32.totalorder %s140, %s141
      %p155 = scmp.eq.s32.totalorder %s23, 1
      %p156 = por %p154, %p155
      %p158 = scmp.ne.s32.totalorder %s141, %s157
      %p159 = scmp.eq.s32.totalorder %s23, 0
      %p160 = por %p158, %p159
      %p161 = scmp.le.s32.totalorder 1, %s17
      %p162 = scmp.lt.s32.totalorder %s17, 3
      %p163 = pnand %p161, %p162
      %p164 = pneg %p163
      // Predicated region
      $region9: #{tpu_custom_call.1} parent=5 // pred_check
        _
      $region10: #{tpu_custom_call.1} parent=5 // pred_check_branch
        %166 = sbr.rel (%p163) target = $region12
      $region11: #{tpu_custom_call.1} parent=5 // pred_region
        %s167 = ssub.s32 %s17, 1
        // Predicated region
        $region13: #{tpu_custom_call.1} parent=11 // pred_check
          %p168 = pneg %p64
        $region14: #{tpu_custom_call.1} parent=11 // pred_check_branch
          %170 = sbr.rel (%p168) target = $region16
        $region15: #{tpu_custom_call.1} parent=11 // pred_region
          _
        $region16: #{tpu_custom_call.1} parent=11 // pred_fallthru
          _
        // Predicated region
        $region17: #{tpu_custom_call.1} parent=11 // pred_check
          %p171 = pneg %p85
        $region18: #{tpu_custom_call.1} parent=11 // pred_check_branch
          %173 = sbr.rel (%p171) target = $region20
        $region19: #{tpu_custom_call.1} parent=11 // pred_region
          _
        $region20: #{tpu_custom_call.1} parent=11 // pred_fallthru
          _
        // Predicated region
        $region21: #{tpu_custom_call.1} parent=11 // pred_check
          %p174 = pneg %p106
        $region22: #{tpu_custom_call.1} parent=11 // pred_check_branch
          %176 = sbr.rel (%p174) target = $region24
        $region23: #{tpu_custom_call.1} parent=11 // pred_region
          _
        $region24: #{tpu_custom_call.1} parent=11 // pred_fallthru
          _
        // Predicated region
        $region25: #{tpu_custom_call.1} parent=11 // pred_check
          %p177 = pneg %p127
        $region26: #{tpu_custom_call.1} parent=11 // pred_check_branch
          %179 = sbr.rel (%p177) target = $region28
        $region27: #{tpu_custom_call.1} parent=11 // pred_region
          _
        $region28: #{tpu_custom_call.1} parent=11 // pred_fallthru
          _
      $region12: #{tpu_custom_call.1} parent=5 // pred_fallthru
        _
      %p180 = scmp.lt.s32.totalorder %s17, 2
      // Predicated region
      $region29: #{tpu_custom_call.1} parent=5 // pred_check
        %p181 = pneg %p180
      $region30: #{tpu_custom_call.1} parent=5 // pred_check_branch
        %183 = sbr.rel (%p181) target = $region32
      $region31: #{tpu_custom_call.1} parent=5 // pred_region
        // Predicated region
        $region33: #{tpu_custom_call.1} parent=31 // pred_check
          %p184 = pneg %p37
        $region34: #{tpu_custom_call.1} parent=31 // pred_check_branch
          %186 = sbr.rel (%p184) target = $region36
        $region35: #{tpu_custom_call.1} parent=31 // pred_region
          %s187 = sand.u32 %s27, 1
          %s188 = scalar_lea.sflag [#allocation3], %s187
          %s189 = sand.u32 %s27, 1
          %s190 = smul.addr %s189, 32
          %s191 = scalar_lea.vmem [#allocation2], %s190
          %s193 = ssub.s32 512, 512
          %194 = vsyncadd %s188, %s193
          %s195 = smul.addr %s17, 4
          %s196 = smul.addr %s195, 128
          %s197 = scalar_lea.hbm %s0, %s196
          %s198 = sshll.u32 %s191, 4
          %s199 = int_to_ptr.vmem [resolvable:$true] %s198
          %204 = dma.hbm_to_vmem [thread:$0]  %s197, 512, %s199, %s188, 128, 128, 8
        $region36: #{tpu_custom_call.1} parent=31 // pred_fallthru
          _
      $region32: #{tpu_custom_call.1} parent=5 // pred_fallthru
        _
      %p205 = scmp.le.s32.totalorder 1, %s17
      %p206 = scmp.lt.s32.totalorder %s17, 3
      %p207 = pnand %p205, %p206
      %p208 = pneg %p207
      // Predicated region
      $region37: #{tpu_custom_call.1} parent=5 // pred_check
        _
      $region38: #{tpu_custom_call.1} parent=5 // pred_check_branch
        %210 = sbr.rel (%p207) target = $region40
      $region39: #{tpu_custom_call.1} parent=5 // pred_region
        %s211 = ssub.s32 %s17, 1
        %s212 = sand.u32 %s30, 1
        %s213 = scalar_lea.sflag [#allocation3], %s212
        %s214 = sand.u32 %s30, 1
        %s215 = smul.addr %s214, 32
        %s216 = scalar_lea.vmem [#allocation2], %s215
        // Predicated region
        $region41: #{tpu_custom_call.1} parent=39 // pred_check
          %p217 = pneg %p43
        $region42: #{tpu_custom_call.1} parent=39 // pred_check_branch
          %219 = sbr.rel (%p217) target = $region44
        $region43: #{tpu_custom_call.1} parent=39 // pred_region
          %220 = dma.done %s213, 512
        $region44: #{tpu_custom_call.1} parent=39 // pred_fallthru
          _
        %s221 = sand.u32 %s30, 1
        %s222 = scalar_lea.sflag [#allocation3], %s221
        %s223 = sand.u32 %s30, 1
        %s224 = smul.addr %s223, 32
        %s225 = scalar_lea.vmem [#allocation2], %s224
        %p226 = pneg %p43
        %p227 = pneg %p40
        %p228 = pneg %p64
        %p229 = pneg %p61
        %p230 = pneg %p85
        %p231 = pneg %p82
        %p232 = pneg %p106
        %p233 = pneg %p103
        %p234 = pneg %p127
        %p235 = pneg %p124
        %p236 = pneg %p153
        %p237 = pneg %p150
        %s238 = sand.u32 %s140, 1
        %s239 = scalar_lea.sflag [#allocation4], %s238
        %s240 = sand.u32 %s140, 1
        %s241 = smul.addr %s240, 32
        %s242 = scalar_lea.vmem [#allocation5], %s241
        %v243 = vld [vmem:[%s216] sm:$0xff]
        %v244 = vld [vmem:[%s216 + $0x8] sm:$0xff]
        %v245 = vld [vmem:[%s216 + $0x10] sm:$0xff]
        %v246 = vld [vmem:[%s216 + $0x18] sm:$0xff]
        %247 = vadd.xlane.f32.xlu0 %v243
        %v248 = vpop.xlane.xlu0 %247
        %249 = vadd.xlane.f32.xlu0 %v244
        %v250 = vpop.xlane.xlu0 %249
        %251 = vadd.xlane.f32.xlu0 %v245
        %v252 = vpop.xlane.xlu0 %251
        %253 = vadd.xlane.f32.xlu0 %v246
        %v254 = vpop.xlane.xlu0 %253
        %v255 = vmul.f32 %v248, 0.0078125
        %v256 = vmul.f32 %v250, 0.0078125
        %v257 = vmul.f32 %v252, 0.0078125
        %v258 = vmul.f32 %v254, 0.0078125
        %v259 = vld [vmem:[%s1] sm:$0xff]
        %v260 = vld [vmem:[%s1 + $0x8] sm:$0xff]
        %v261 = vld [vmem:[%s1 + $0x10] sm:$0xff]
        %v262 = vld [vmem:[%s1 + $0x18] sm:$0xff]
        %v263 = vld [vmem:[%s2] sm:$0x1]
        %v268 = vlaneseq
        %v269 = vand.u32 %v268, 127
        %v270 = vlaneseq
        %v271 = vshrl.u32 %v270, 7
        %v272 = vsub.s32 %v269, %v271
        %v273 = vrot.slane %v255, %v272
        %v274 = vadd.s32 %v269, 4294967288
        %v275 = vlaneseq
        %v276 = vshrl.u32 %v275, 7
        %v277 = vsub.s32 %v274, %v276
        %v278 = vrot.slane %v256, %v277
        %vm279 = vcmask 130112
        %v280 = vsel %vm279, %v278, %v273
        %v281 = vadd.s32 %v269, 4294967280
        %v282 = vlaneseq
        %v283 = vshrl.u32 %v282, 7
        %v284 = vsub.s32 %v281, %v283
        %v285 = vrot.slane %v257, %v284
        %vm286 = vcmask 195712
        %v287 = vsel %vm286, %v285, %v280
        %v288 = vadd.s32 %v269, 4294967272
        %v289 = vlaneseq
        %v290 = vshrl.u32 %v289, 7
        %v291 = vsub.s32 %v288, %v290
        %v292 = vrot.slane %v258, %v291
        %vm293 = vcmask 261312
        %v294 = vsel %vm293, %v292, %v287
        %vm295 = vcmask 261120
        %v296 = vsel %vm295, %v294, 0
        %298 = vmatprep.subr.mxu0 0.0
        %299 = vmatpush1.msra.mxu0 0.0
        %300 = vmatprep.subr.mxu0 0.0
        %301 = vmatpush1.msra.mxu0 0.0
        %302 = vmatprep.subr.mxu0 0.0
        %303 = vmatpush1.msra.mxu0 0.0
        %304 = vmatprep.subr.mxu0 0.0
        %305 = vmatpush1.msra.mxu0 0.0
        %306 = vmatprep.subr.mxu0 0.0
        %307 = vmatpush1.msra.mxu0 0.0
        %308 = vmatprep.subr.mxu0 0.0
        %309 = vmatpush1.msra.mxu0 0.0
        %310 = vmatprep.subr.mxu0 0.0
        %311 = vmatpush1.msra.mxu0 0.0
        %312 = vmatprep.subr.mxu0 0.0
        %313 = vmatpush1.msra.mxu0 0.0
        %314 = vmatprep.subr.mxu0 0.0
        %315 = vmatpush1.msra.mxu0 0.0
        %316 = vmatprep.subr.mxu0 0.0
        %317 = vmatpush1.msra.mxu0 0.0
        %318 = vmatprep.subr.mxu0 0.0
        %319 = vmatpush1.msra.mxu0 0.0
        %320 = vmatprep.subr.mxu0 0.0
        %321 = vmatpush1.msra.mxu0 0.0
        %322 = vmatprep.subr.mxu0 0.0
        %323 = vmatpush1.msra.mxu0 %v262
        %324 = vmatprep.subr.mxu0 0.0
        %325 = vmatpush1.msra.mxu0 %v261
        %326 = vmatprep.subr.mxu0 0.0
        %327 = vmatpush1.msra.mxu0 %v260
        %328 = vmatprep.subr.mxu0 0.0
        %329 = vmatpush1.msra.mxu0 %v259
        %330 = vmatprep.subr.mxu0 0.0
        %331 = vmatpush2.msra.mxu0 0.0
        %332 = vmatprep.subr.mxu0 0.0
        %333 = vmatpush2.msra.mxu0 0.0
        %334 = vmatprep.subr.mxu0 0.0
        %335 = vmatpush2.msra.mxu0 0.0
        %336 = vmatprep.subr.mxu0 0.0
        %337 = vmatpush2.msra.mxu0 0.0
        %338 = vmatprep.subr.mxu0 0.0
        %339 = vmatpush2.msra.mxu0 0.0
        %340 = vmatprep.subr.mxu0 0.0
        %341 = vmatpush2.msra.mxu0 0.0
        %342 = vmatprep.subr.mxu0 0.0
        %343 = vmatpush2.msra.mxu0 0.0
        %344 = vmatprep.subr.mxu0 0.0
        %345 = vmatpush2.msra.mxu0 0.0
        %346 = vmatprep.subr.mxu0 0.0
        %347 = vmatpush2.msra.mxu0 0.0
        %348 = vmatprep.subr.mxu0 0.0
        %349 = vmatpush2.msra.mxu0 0.0
        %350 = vmatprep.subr.mxu0 0.0
        %351 = vmatpush2.msra.mxu0 0.0
        %352 = vmatprep.subr.mxu0 0.0
        %353 = vmatpush2.msra.mxu0 0.0
        %354 = vmatprep.subr.mxu0 0.0
        %355 = vmatpush2.msra.mxu0 0.0
        %356 = vmatprep.subr.mxu0 0.0
        %357 = vmatpush2.msra.mxu0 0.0
        %358 = vmatprep.subr.mxu0 0.0
        %359 = vmatpush2.msra.mxu0 0.0
        %360 = vmatprep.subr.mxu0 0.0
        %361 = vmatpush2.msra.mxu0 0.0
        %362 = vmatprep.mubr.f32.mxu0 0.0
        %363 = vmatmul.mubr.f32.gmra.mxu0 %v296
        %v364 = vpop.f32.mrf.mxu0
        %v365 = vadd.f32 %v263, %v364
        %v366 = vpop.f32.mrf.mxu0
        %367 = vdwg.mxu0
        %v368 = vxor.u32 %v365, 2147483648
        %v369 = vmul.f32 %v368, 1.442695
        %v370 = vpow.pop %v369
        %v371 = vadd.f32 %v370, 1.0
        %v372 = vrcp.pop %v371
        %v373 = vmul.f32 1.0, %v372
        %v374 = vmul.f32 %v365, %v373
        %v375 = vld [vmem:[%s3] sm:$0xff]
        %v376 = vld [vmem:[%s4] sm:$0x1]
        %vm377 = vcmask 64512
        %v379 = vsel %vm377, %v374, 0
        %381 = vmatprep.subr.mxu0 0.0
        %382 = vmatpush1.msra.mxu0 0.0
        %383 = vmatprep.subr.mxu0 0.0
        %384 = vmatpush1.msra.mxu0 0.0
        %385 = vmatprep.subr.mxu0 0.0
        %386 = vmatpush1.msra.mxu0 0.0
        %387 = vmatprep.subr.mxu0 0.0
        %388 = vmatpush1.msra.mxu0 0.0
        %389 = vmatprep.subr.mxu0 0.0
        %390 = vmatpush1.msra.mxu0 0.0
        %391 = vmatprep.subr.mxu0 0.0
        %392 = vmatpush1.msra.mxu0 0.0
        %393 = vmatprep.subr.mxu0 0.0
        %394 = vmatpush1.msra.mxu0 0.0
        %395 = vmatprep.subr.mxu0 0.0
        %396 = vmatpush1.msra.mxu0 0.0
        %397 = vmatprep.subr.mxu0 0.0
        %398 = vmatpush1.msra.mxu0 0.0
        %399 = vmatprep.subr.mxu0 0.0
        %400 = vmatpush1.msra.mxu0 0.0
        %401 = vmatprep.subr.mxu0 0.0
        %402 = vmatpush1.msra.mxu0 0.0
        %403 = vmatprep.subr.mxu0 0.0
        %404 = vmatpush1.msra.mxu0 0.0
        %405 = vmatprep.subr.mxu0 0.0
        %406 = vmatpush1.msra.mxu0 0.0
        %407 = vmatprep.subr.mxu0 0.0
        %408 = vmatpush1.msra.mxu0 0.0
        %409 = vmatprep.subr.mxu0 0.0
        %410 = vmatpush1.msra.mxu0 0.0
        %411 = vmatprep.subr.mxu0 0.0
        %412 = vmatpush1.msra.mxu0 %v375
        %413 = vmatprep.subr.mxu0 0.0
        %414 = vmatpush2.msra.mxu0 0.0
        %415 = vmatprep.subr.mxu0 0.0
        %416 = vmatpush2.msra.mxu0 0.0
        %417 = vmatprep.subr.mxu0 0.0
        %418 = vmatpush2.msra.mxu0 0.0
        %419 = vmatprep.subr.mxu0 0.0
        %420 = vmatpush2.msra.mxu0 0.0
        %421 = vmatprep.subr.mxu0 0.0
        %422 = vmatpush2.msra.mxu0 0.0
        %423 = vmatprep.subr.mxu0 0.0
        %424 = vmatpush2.msra.mxu0 0.0
        %425 = vmatprep.subr.mxu0 0.0
        %426 = vmatpush2.msra.mxu0 0.0
        %427 = vmatprep.subr.mxu0 0.0
        %428 = vmatpush2.msra.mxu0 0.0
        %429 = vmatprep.subr.mxu0 0.0
        %430 = vmatpush2.msra.mxu0 0.0
        %431 = vmatprep.subr.mxu0 0.0
        %432 = vmatpush2.msra.mxu0 0.0
        %433 = vmatprep.subr.mxu0 0.0
        %434 = vmatpush2.msra.mxu0 0.0
        %435 = vmatprep.subr.mxu0 0.0
        %436 = vmatpush2.msra.mxu0 0.0
        %437 = vmatprep.subr.mxu0 0.0
        %438 = vmatpush2.msra.mxu0 0.0
        %439 = vmatprep.subr.mxu0 0.0
        %440 = vmatpush2.msra.mxu0 0.0
        %441 = vmatprep.subr.mxu0 0.0
        %442 = vmatpush2.msra.mxu0 0.0
        %443 = vmatprep.subr.mxu0 0.0
        %444 = vmatpush2.msra.mxu0 0.0
        %445 = vmatprep.mubr.f32.mxu0 0.0
        %446 = vmatmul.mubr.f32.gmra.mxu0 %v379
        %v447 = vpop.f32.mrf.mxu0
        %v448 = vadd.f32 %v376, %v447
        %v449 = vpop.f32.mrf.mxu0
        %450 = vdwg.mxu0
        %v451 = vxor.u32 %v448, 2147483648
        %v452 = vmul.f32 %v451, 1.442695
        %v453 = vpow.pop %v452
        %v454 = vadd.f32 %v453, 1.0
        %v455 = vrcp.pop %v454
        %v456 = vmul.f32 1.0, %v455
        %v457 = vlaneseq
        %v458 = vshrl.u32 %v457, 7
        %v459 = vsub.s32 0, %v458
        %v460 = vrot.slane %v456, %v459
        %462 = vbcast.lane.b32.xlu0 %v460, 256
        %v463 = vpop.permute.xlu0 %462
        %s465 = sor.u32 256, 8
        %466 = vbcast.lane.b32.xlu0 %v460, %s465
        %v467 = vpop.permute.xlu0 %466
        %s469 = sor.u32 256, 16
        %470 = vbcast.lane.b32.xlu0 %v460, %s469
        %v471 = vpop.permute.xlu0 %470
        %s473 = sor.u32 256, 24
        %474 = vbcast.lane.b32.xlu0 %v460, %s473
        %v475 = vpop.permute.xlu0 %474
        %v476 = vmul.f32 %v243, %v463
        %v477 = vmul.f32 %v244, %v467
        %v478 = vmul.f32 %v245, %v471
        %v479 = vmul.f32 %v246, %v475
        %480 = vst [vmem:[%s242] sm:$0xff] %v476
        %481 = vst [vmem:[%s242 + $0x8] sm:$0xff] %v477
        %482 = vst [vmem:[%s242 + $0x10] sm:$0xff] %v478
        %483 = vst [vmem:[%s242 + $0x18] sm:$0xff] %v479
        %s484 = sand.u32 %s140, 1
        %s485 = scalar_lea.sflag [#allocation4], %s484
        %s486 = sand.u32 %s140, 1
        %s487 = smul.addr %s486, 32
        %s488 = scalar_lea.vmem [#allocation5], %s487
        // Predicated region
        $region45: #{tpu_custom_call.1} parent=39 // pred_check
          %p489 = pneg %p150
        $region46: #{tpu_custom_call.1} parent=39 // pred_check_branch
          %491 = sbr.rel (%p489) target = $region48
        $region47: #{tpu_custom_call.1} parent=39 // pred_region
          %s493 = ssub.s32 512, 512
          %494 = vsyncadd %s485, %s493
          %s495 = smul.addr %s22, 4
          %s496 = smul.addr %s495, 128
          %s497 = scalar_lea.hbm %s5, %s496
          %s498 = sshll.u32 %s488, 4
          %s499 = int_to_ptr.vmem [resolvable:$true] %s498
          %504 = dma.vmem_to_hbm [thread:$0]  %s499, 512, %s497, %s485, 128, 128, 8
        $region48: #{tpu_custom_call.1} parent=39 // pred_fallthru
          _
      $region40: #{tpu_custom_call.1} parent=5 // pred_fallthru
        _
      %p505 = scmp.le.s32.totalorder 2, %s17
      // Predicated region
      $region49: #{tpu_custom_call.1} parent=5 // pred_check
        %p506 = pneg %p505
      $region50: #{tpu_custom_call.1} parent=5 // pred_check_branch
        %508 = sbr.rel (%p506) target = $region52
      $region51: #{tpu_custom_call.1} parent=5 // pred_region
        %s509 = ssub.s32 %s17, 2
        // Predicated region
        $region53: #{tpu_custom_call.1} parent=51 // pred_check
          %p510 = pneg %p156
        $region54: #{tpu_custom_call.1} parent=51 // pred_check_branch
          %512 = sbr.rel (%p510) target = $region56
        $region55: #{tpu_custom_call.1} parent=51 // pred_region
          %s513 = sand.u32 %s141, 1
          %s514 = scalar_lea.sflag [#allocation4], %s513
          %s515 = sand.u32 %s141, 1
          %s516 = smul.addr %s515, 32
          %s517 = scalar_lea.vmem [#allocation5], %s516
          %518 = dma.done %s514, 512
        $region56: #{tpu_custom_call.1} parent=51 // pred_fallthru
          _
      $region52: #{tpu_custom_call.1} parent=5 // pred_fallthru
        _
    $region6: #{tpu_custom_call.1} parent=1 // loop_footer
      %s21 = sadd.s32 1, %s17
    $region7: #{tpu_custom_call.1} parent=1 // loop_footer_branch
      %16 = sbr.rel target = $region3
    $region8: #{tpu_custom_call.1} parent=1 // loop_exit
      _
    %519 = vsyncpa [#allocation3], 1
    %s520 = scalar_lea.sflag [#allocation3], 1
    %521 = vsyncpa %s520, 1
    %522 = vsyncpa [#allocation4], 1
    %s523 = scalar_lea.sflag [#allocation4], 1
    %524 = vsyncpa %s523, 1

</llo_original>
